<compile_context>
chip_gen: v7x
topology: tpu7x:2x2x1
jax: 0.10.0
libtpu: 0.0.40
codegen_flags: <defaults>
</compile_context>

<pallas_src>
import functools

import jax
import jax.numpy as jnp
from jax import lax
from jax.experimental import pallas as pl
from jax.experimental.pallas import tpu as pltpu

LANE = 128             # lane width (minor dim)
MAX_BLOCK_ROWS = 4096  # 4096*128*4B = 2 MiB per f32 block per step; worst case
                       # (f32 targets) 2 inputs x 2 buffers x 2 MiB = 8 MiB VMEM,
                       # under v5e's 16 MiB scoped default (v6e/v7x: 32 MiB).

_TC_CACHE = None


def _tensorcores_per_chip():
    """Best-effort TensorCores per JAX device (v5e/v6e: 1, v4/v5p/v7x: 2)."""
    global _TC_CACHE
    if _TC_CACHE is None:
        try:
            kind = jax.devices()[0].device_kind.lower()
            single_tc = ("v5e", "v5 lite", "v5lite", "v6e", "v6 lite", "v6lite")
            _TC_CACHE = 1 if any(s in kind for s in single_tc) else 2
        except Exception:
            _TC_CACHE = 2
    return _TC_CACHE


def _focal_partial_kernel(t_ref, x_ref, o_ref, *, blocks_per_core, block_rows,
                          n_valid, gamma, binary_targets, any_partial):
    c = pl.program_id(0)   # per-TensorCore chunk ("parallel")
    i = pl.program_id(1)   # row-block within the chunk ("arbitrary" reduction)

    @pl.when(i == 0)
    def _():
        o_ref[...] = jnp.zeros_like(o_ref)

    x = x_ref[...].astype(jnp.float32)          # raw logits (cast in-kernel)

    # torch.sigmoid(input): one EUP tanh (exact identity, no exp + divide).
    s = 0.5 * jnp.tanh(0.5 * x) + 0.5
    # Only other transcendental the BCE term needs:
    #   log1p(exp(-s)) == -log(sigmoid(s)),  sigmoid(s) via one more tanh.
    sig_s = 0.5 * jnp.tanh(0.5 * s) + 0.5
    nls = -jnp.log(sig_s)                       # = log1p(exp(-s)), s in (0,1)

    if binary_targets:
        # Targets are {0,1}: pt = exp(-bce) collapses to a pure select,
        # removing the exp(-bce) EUP op entirely.
        tb = t_ref[...].astype(jnp.float32) > 0.5
        bce = jnp.where(tb, 0.0, s) + nls       # s - s*t + log1p(exp(-s))
        pt = jnp.where(tb, sig_s, 1.0 - sig_s)  # exp(-bce), no transcendental
    else:
        # Soft-label fallback: keep the explicit exp(-bce).
        t = t_ref[...].astype(jnp.float32)
        bce = s - s * t + nls
        pt = jnp.exp(-bce)

    # focal weight: (1 - pt)**gamma, with a multiply chain for integer gamma.
    omp = 1.0 - pt
    g = float(gamma)
    if g.is_integer() and 0.0 <= g <= 16.0:
        gi = int(g)
        w = jnp.ones_like(omp) if gi == 0 else omp
        for _ in range(max(gi - 1, 0)):
            w = w * omp                          # gamma=2 -> one multiply
    else:
        w = jnp.power(omp, g)                    # non-integer gamma fallback
    fl = w * bce                                 # alpha applied once in wrapper

    def _accumulate(vals):
        # Per-sublane-group partials only (pure VPU adds); the cross-lane /
        # cross-sublane reduce happens once in the wrapper on a tiny array.
        o_ref[...] += jnp.sum(vals.reshape(block_rows // 8, 8, LANE), axis=0)

    if any_partial:
        blk_start = (c * blocks_per_core + i) * (block_rows * LANE)
        blk_end = blk_start + block_rows * LANE
        fully_valid = blk_end <= n_valid

        @pl.when(fully_valid)
        def _():
            _accumulate(fl)                      # hot path: no iota/compare/select

        @pl.when(jnp.logical_not(fully_valid))
        def _():
            row = lax.broadcasted_iota(jnp.int32, (block_rows, LANE), 0)
            col = lax.broadcasted_iota(jnp.int32, (block_rows, LANE), 1)
            gidx = blk_start + row * LANE + col
            _accumulate(jnp.where(gidx < n_valid, fl, 0.0))
    else:
        _accumulate(fl)


def focal_loss(target, logits, gamma=2.0, alpha=0.25, binary_targets=None):
    x = logits.reshape(-1)
    t = target.reshape(-1)
    n = x.shape[0]
    if n == 0:
        return jnp.float32(jnp.nan)  # torch.mean over empty -> nan

    # {0,1} targets (bool / integer dtype) enable the cheaper pt path.
    if binary_targets is None:
        binary_targets = (t.dtype == jnp.bool_) or jnp.issubdtype(t.dtype, jnp.integer)
    # Do NOT upcast targets to f32 in the wrapper: stream them at 1 B/elem.
    if t.dtype == jnp.bool_:
        t = t.astype(jnp.int8)

    # Pad only when actually needed: the (rows, LANE) view needs n % 128 == 0;
    # the in-kernel (block_rows//8, 8, LANE) partial sum additionally needs
    # block_rows % 8 == 0, which only matters when a single block covers the
    # whole array (small inputs) -> round those up to 8*LANE.
    rows_lane = pl.cdiv(n, LANE)
    if rows_lane <= MAX_BLOCK_ROWS and rows_lane % 8 != 0:
        n_pad = pl.cdiv(n, 8 * LANE) * (8 * LANE)
    else:
        n_pad = rows_lane * LANE
    if n_pad != n:
        x = jnp.pad(x, (0, n_pad - n))
        t = jnp.pad(t, (0, n_pad - n))
    rows = n_pad // LANE
    x2 = x.reshape(rows, LANE)
    t2 = t.reshape(rows, LANE)

    block_rows = min(MAX_BLOCK_ROWS, rows)       # multiple of 8 (or full extent)
    n_blocks = pl.cdiv(rows, block_rows)
    ncores = _tensorcores_per_chip() if n_blocks >= 2 else 1
    bpc = pl.cdiv(n_blocks, ncores)
    covered = ncores * bpc * block_rows * LANE
    any_partial = covered != n                   # emit masking code only if needed
    last_blk = n_blocks - 1

    kernel = functools.partial(
        _focal_partial_kernel,
        blocks_per_core=bpc, block_rows=block_rows, n_valid=n,
        gamma=float(gamma), binary_targets=bool(binary_targets),
        any_partial=any_partial)

    # Clamp the row-block index so a (possible) fully-out-of-range logical block
    # re-reads the last valid block; its contribution is zeroed by the mask.
    in_map = lambda c, i: (jnp.minimum(c * bpc + i, last_blk), 0)

    n_trans = 3 if binary_targets else 4
    cost = pl.CostEstimate(
        flops=12 * covered,
        transcendentals=n_trans * covered,
        bytes_accessed=covered * (x2.dtype.itemsize + t2.dtype.itemsize)
        + ncores * 8 * LANE * 4)

    partial = pl.pallas_call(
        kernel,
        out_shape=jax.ShapeDtypeStruct((ncores * 8, LANE), jnp.float32),
        grid_spec=pltpu.PrefetchScalarGridSpec(
            num_scalar_prefetch=0,
            grid=(ncores, bpc),
            in_specs=[
                pl.BlockSpec((block_rows, LANE), in_map),
                pl.BlockSpec((block_rows, LANE), in_map),
            ],
            out_specs=pl.BlockSpec((8, LANE), lambda c, i: (c, 0)),
        ),
        compiler_params=pltpu.CompilerParams(
            dimension_semantics=("parallel", "arbitrary"),
        ),
        cost_estimate=cost,
    )(t2, x2)

    # final reduction of the small lane-dense partials; alpha hoisted here.
    return (alpha * jnp.sum(partial) / n).astype(jnp.float32)


def _ref_focal_loss(target, logits, gamma=2.0, alpha=0.25):
    s = jax.nn.sigmoid(logits.reshape(-1).astype(jnp.float32))
    t = target.reshape(-1).astype(jnp.float32)
    bce = jnp.maximum(s, 0.0) - s * t + jnp.log1p(jnp.exp(-jnp.abs(s)))
    pt = jnp.exp(-bce)
    return jnp.mean(alpha * (1.0 - pt) ** gamma * bce)


if __name__ == "__main__":
    key = jax.random.PRNGKey(0)
    k1, k2 = jax.random.split(key)
    # NCHW-shaped example inputs (layout is irrelevant after flattening).
    input_logits = jax.random.normal(k1, (2, 4, 16, 16), dtype=jnp.float32)
    target_bool = jax.random.bernoulli(k2, 0.5, (2, 4, 16, 16))   # bool labels

    ref = _ref_focal_loss(target_bool, input_logits)

    # Binary-target fast path (bool targets streamed as int8).
    out = jax.block_until_ready(focal_loss(target_bool, input_logits,
                                           gamma=2.0, alpha=0.25))
    assert jnp.allclose(out, ref, rtol=1e-5, atol=2e-6), (out, ref)

    # Soft-label fallback path (float targets, explicit exp(-bce)).
    out_soft = jax.block_until_ready(
        focal_loss(target_bool.astype(jnp.float32), input_logits,
                   gamma=2.0, alpha=0.25))
    assert jnp.allclose(out_soft, ref, rtol=1e-5, atol=2e-6), (out_soft, ref)

    print("KERNEL_OK")
</pallas_src>

<mosaic_0001>
module attributes {stable_mosaic.version = 11 : i64} {
  func.func @_focal_partial_kernel(%arg0: i32, %arg1: i32, %arg2: memref<16x128xi8, #tpu.memory_space<vmem>>, %arg3: memref<16x128xf32, #tpu.memory_space<vmem>>, %arg4: memref<8x128xf32, #tpu.memory_space<vmem>>) attributes {dimension_semantics = [#tpu.dimension_semantics<parallel>, #tpu.dimension_semantics<arbitrary>], iteration_bounds = array<i64: 1, 1>, scalar_prefetch = 0 : i64, scratch_operands = 0 : i64, tpu.core_type = #tpu.core_type<tc>, window_params = [{transform_indices = @transform_0, window_bounds = array<i64: 16, 128>}, {transform_indices = @transform_1, window_bounds = array<i64: 16, 128>}, {transform_indices = @transform_2, window_bounds = array<i64: 8, 128>}]} {
    %c0_i32 = arith.constant 0 : i32
    %0 = arith.cmpi eq, %arg1, %c0_i32 : i32
    %1 = arith.extui %0 : i1 to i32
    %c0_i32_0 = arith.constant 0 : i32
    %2 = arith.cmpi ne, %1, %c0_i32_0 : i32
    scf.if %2 {
      %cst_19 = arith.constant 0.000000e+00 : f32
      %40 = vector.broadcast %cst_19 : f32 to vector<8x128xf32>
      %c0_20 = arith.constant 0 : index
      %c0_21 = arith.constant 0 : index
      %41 = vector.load %arg4[%c0_20, %c0_21] : memref<8x128xf32, #tpu.memory_space<vmem>>, vector<8x128xf32>
      tpu.vector_store %arg4[%c0_20, %c0_21], %40 {strides = array<i32>} : memref<8x128xf32, #tpu.memory_space<vmem>>, vector<8x128xf32>,
    } else {
    }
    %c0 = arith.constant 0 : index
    %c0_1 = arith.constant 0 : index
    %3 = vector.load %arg3[%c0, %c0_1] : memref<16x128xf32, #tpu.memory_space<vmem>>, vector<16x128xf32>
    %cst = arith.constant 5.000000e-01 : f32
    %4 = vector.broadcast %cst : f32 to vector<16x128xf32>
    %5 = arith.mulf %4, %3 : vector<16x128xf32>
    %6 = math.tanh %5 : vector<16x128xf32>
    %cst_2 = arith.constant 5.000000e-01 : f32
    %7 = vector.broadcast %cst_2 : f32 to vector<16x128xf32>
    %8 = arith.mulf %7, %6 : vector<16x128xf32>
    %cst_3 = arith.constant 5.000000e-01 : f32
    %9 = vector.broadcast %cst_3 : f32 to vector<16x128xf32>
    %10 = arith.addf %8, %9 : vector<16x128xf32>
    %cst_4 = arith.constant 5.000000e-01 : f32
    %11 = vector.broadcast %cst_4 : f32 to vector<16x128xf32>
    %12 = arith.mulf %11, %10 : vector<16x128xf32>
    %13 = math.tanh %12 : vector<16x128xf32>
    %cst_5 = arith.constant 5.000000e-01 : f32
    %14 = vector.broadcast %cst_5 : f32 to vector<16x128xf32>
    %15 = arith.mulf %14, %13 : vector<16x128xf32>
    %cst_6 = arith.constant 5.000000e-01 : f32
    %16 = vector.broadcast %cst_6 : f32 to vector<16x128xf32>
    %17 = arith.addf %15, %16 : vector<16x128xf32>
    %18 = math.log %17 : vector<16x128xf32>
    %cst_7 = arith.constant 0.000000e+00 : f32
    %19 = vector.broadcast %cst_7 : f32 to vector<16x128xf32>
    %20 = arith.subf %19, %18 : vector<16x128xf32>
    %c0_8 = arith.constant 0 : index
    %c0_9 = arith.constant 0 : index
    %21 = vector.load %arg2[%c0_8, %c0_9] : memref<16x128xi8, #tpu.memory_space<vmem>>, vector<16x128xi8>
    %22 = arith.sitofp %21 : vector<16x128xi8> to vector<16x128xf32>
    %cst_10 = arith.constant 5.000000e-01 : f32
    %23 = vector.broadcast %cst_10 : f32 to vector<16x128xf32>
    %24 = arith.cmpf ogt, %22, %23 : vector<16x128xf32>
    %cst_11 = arith.constant 0.000000e+00 : f32
    %25 = vector.broadcast %cst_11 : f32 to vector<16x128xf32>
    %26 = arith.select %24, %25, %10 : vector<16x128xi1>, vector<16x128xf32>
    %27 = arith.addf %26, %20 : vector<16x128xf32>
    %cst_12 = arith.constant 1.000000e+00 : f32
    %28 = vector.broadcast %cst_12 : f32 to vector<16x128xf32>
    %29 = arith.subf %28, %17 : vector<16x128xf32>
    %30 = arith.select %24, %17, %29 : vector<16x128xi1>, vector<16x128xf32>
    %cst_13 = arith.constant 1.000000e+00 : f32
    %31 = vector.broadcast %cst_13 : f32 to vector<16x128xf32>
    %32 = arith.subf %31, %30 : vector<16x128xf32>
    %33 = arith.mulf %32, %32 : vector<16x128xf32>
    %34 = arith.mulf %33, %27 : vector<16x128xf32>
    %c0_14 = arith.constant 0 : index
    %c0_15 = arith.constant 0 : index
    %35 = vector.load %arg4[%c0_14, %c0_15] : memref<8x128xf32, #tpu.memory_space<vmem>>, vector<8x128xf32>
    %36 = vector.shape_cast %34 : vector<16x128xf32> to vector<2x8x128xf32>
    %cst_16 = arith.constant dense<0.000000e+00> : vector<8x128xf32>
    %37 = vector.multi_reduction <add>, %36, %cst_16 [0] : vector<2x8x128xf32> to vector<8x128xf32>
    %38 = arith.addf %35, %37 : vector<8x128xf32>
    %c0_17 = arith.constant 0 : index
    %c0_18 = arith.constant 0 : index
    %39 = vector.load %arg4[%c0_17, %c0_18] : memref<8x128xf32, #tpu.memory_space<vmem>>, vector<8x128xf32>
    tpu.vector_store %arg4[%c0_17, %c0_18], %38 {strides = array<i32>} : memref<8x128xf32, #tpu.memory_space<vmem>>, vector<8x128xf32>,
    return
  }
  func.func @transform_0(%arg0: i32, %arg1: i32) -> (i32, i32) {
    %c1_i32 = arith.constant 1 : i32
    %0 = arith.muli %arg0, %c1_i32 : i32
    %1 = arith.addi %0, %arg1 : i32
    %c0_i32 = arith.constant 0 : i32
    %2 = arith.minsi %1, %c0_i32 : i32
    %c0_i32_0 = arith.constant 0 : i32
    %c0_i32_1 = arith.constant 0 : i32
    return %2, %c0_i32_0 : i32, i32
  }
  func.func @transform_1(%arg0: i32, %arg1: i32) -> (i32, i32) {
    %c1_i32 = arith.constant 1 : i32
    %0 = arith.muli %arg0, %c1_i32 : i32
    %1 = arith.addi %0, %arg1 : i32
    %c0_i32 = arith.constant 0 : i32
    %2 = arith.minsi %1, %c0_i32 : i32
    %c0_i32_0 = arith.constant 0 : i32
    %c0_i32_1 = arith.constant 0 : i32
    return %2, %c0_i32_0 : i32, i32
  }
  func.func @transform_2(%arg0: i32, %arg1: i32) -> (i32, i32) {
    %c0_i32 = arith.constant 0 : i32
    %c0_i32_0 = arith.constant 0 : i32
    return %arg0, %c0_i32 : i32, i32
  }
}

</mosaic_0001>

<llo_original>
// kernel: tpu_custom_call.1
$region0: #{tpu_custom_call.1}
  #allocation0 [shape = 'u32[]', space=smem, size = 0x4, offset = 0x4, fixed_abs, tag = 'smem constant byte address 0x4 - core index']
  #allocation1 [shape = 'u32[144,128]{1,0:T(1,128)}', space=vmem, size = 0x12000, scoped, tag = 'internal scratch']
  %s0 = inlined_call_operand.hbm [shape: s8[16,128], index: 0, kind: input, shape index: {}]
  %s1 = inlined_call_operand.hbm [shape: f32[16,128], index: 1, kind: input, shape index: {}]
  %s2 = inlined_call_operand.hbm [shape: f32[8,128], index: 2, kind: output, shape index: {}]
  %s3 = sld [smem:[#allocation0]]
  $region30: #{tpu_custom_call.1} parent=0
    _
  %s5 = ssub.s32 1, %s3
  %s6 = scalar_select 0, %s5, %s3
  $region1: #{tpu_custom_call.1} parent=0
    #allocation2 [shape = 'u8[2048]{0}', space=vmem, size = 0x800, scoped, tag = 'input window, operand 0, single buffered']
    #allocation3 [shape = 's32[1]{0}', space=sflag, size = 0x4, scoped, tag = 'scoped memory for tpu_custom_call.1']
    #allocation4 [shape = 's32[1]{0}', space=sflag, size = 0x4, scoped, tag = 'scoped memory for tpu_custom_call.1']
    #allocation5 [shape = 'u8[8192]{0}', space=vmem, size = 0x2000, scoped, tag = 'input window, operand 1, single buffered']
    #allocation6 [shape = 's32[1]{0}', space=sflag, size = 0x4, scoped, tag = 'scoped memory for tpu_custom_call.1']
    #allocation7 [shape = 'u8[4096]{0}', space=vmem, size = 0x1000, scoped, tag = 'output window, operand 0, single buffered']
    %7 = vsyncpa [#allocation3], 0
    %8 = vsyncpa [#allocation6], 0
    %9 = vsyncpa [#allocation4], 0
    // Predicated region
    $region2: #{tpu_custom_call.1} parent=1 // pred_check
      _
    $region3: #{tpu_custom_call.1} parent=1 // pred_check_branch
      %11 = sbr.rel (0) target = $region5
    $region4: #{tpu_custom_call.1} parent=1 // pred_region
      %s12 = sadd.s32 0, 0
      %p13 = scmp.lt.s32.totalorder %s12, 0
      %s14 = scalar_select %p13, %s12, 0
      %s15 = smul.u32 2, %s14
      %s17 = ssub.s32 64, 64
      %18 = vsyncadd [#allocation3], %s17
      %s19 = smul.addr %s15, 32
      %s20 = scalar_lea.hbm %s0, %s19
      %s21 = sshll.u32 [#allocation2], 4
      %s22 = int_to_ptr.vmem [resolvable:$true] %s21
      %27 = dma.hbm_to_vmem [thread:$0]  %s20, 64, %s22, [#allocation3], 32, 32, 2
    $region5: #{tpu_custom_call.1} parent=1 // pred_fallthru
      _
    // Predicated region
    $region6: #{tpu_custom_call.1} parent=1 // pred_check
      _
    $region7: #{tpu_custom_call.1} parent=1 // pred_check_branch
      %29 = sbr.rel (0) target = $region9
    $region8: #{tpu_custom_call.1} parent=1 // pred_region
      %s30 = sadd.s32 0, 0
      %p31 = scmp.lt.s32.totalorder %s30, 0
      %s32 = scalar_select %p31, %s30, 0
      %s33 = smul.u32 2, %s32
      %s35 = ssub.s32 256, 256
      %36 = vsyncadd [#allocation6], %s35
      %s37 = smul.addr %s33, 128
      %s38 = scalar_lea.hbm %s1, %s37
      %s39 = sshll.u32 [#allocation5], 4
      %s40 = int_to_ptr.vmem [resolvable:$true] %s39
      %45 = dma.hbm_to_vmem [thread:$0]  %s38, 256, %s40, [#allocation6], 128, 128, 8
    $region9: #{tpu_custom_call.1} parent=1 // pred_fallthru
      _
    // Predicated region
    $region10: #{tpu_custom_call.1} parent=1 // pred_check
      _
    $region11: #{tpu_custom_call.1} parent=1 // pred_check_branch
      %47 = sbr.rel (0) target = $region13
    $region12: #{tpu_custom_call.1} parent=1 // pred_region
      %48 = dma.done [#allocation3], 64
    $region13: #{tpu_custom_call.1} parent=1 // pred_fallthru
      _
    // Predicated region
    $region14: #{tpu_custom_call.1} parent=1 // pred_check
      _
    $region15: #{tpu_custom_call.1} parent=1 // pred_check_branch
      %50 = sbr.rel (0) target = $region17
    $region16: #{tpu_custom_call.1} parent=1 // pred_region
      %51 = dma.done [#allocation6], 256
    $region17: #{tpu_custom_call.1} parent=1 // pred_fallthru
      _
    %s52 = sadd.s32 0, 0
    %p53 = scmp.lt.s32.totalorder %s52, 0
    %s54 = scalar_select %p53, %s52, 0
    %s55 = smul.u32 2, %s54
    %s56 = sadd.s32 0, 0
    %p57 = scmp.lt.s32.totalorder %s56, 0
    %s58 = scalar_select %p57, %s56, 0
    %s59 = smul.u32 2, %s58
    %p60 = scmp.eq.s32.totalorder 0, 0
    // Predicated region
    $region18: #{tpu_custom_call.1} parent=1 // pred_check
      %p61 = pneg %p60
    $region19: #{tpu_custom_call.1} parent=1 // pred_check_branch
      %63 = sbr.rel (%p61) target = $region21
    $region20: #{tpu_custom_call.1} parent=1 // pred_region
      %64 = vst [vmem:[#allocation7] sm:$0xff] 0.0
    $region21: #{tpu_custom_call.1} parent=1 // pred_fallthru
      _
    %v65 = vld [vmem:[#allocation5] sm:$0xff]
    %v66 = vld [vmem:[#allocation5 + $0x8] sm:$0xff]
    %v67 = vmul.f32 %v65, 0.5
    %v68 = vmul.f32 %v66, 0.5
    %v69 = vtanh.pop %v67
    %v70 = vtanh.pop %v68
    %v71 = vmul.f32 %v69, 0.5
    %v72 = vmul.f32 %v70, 0.5
    %v73 = vadd.f32 %v71, 0.5
    %v74 = vadd.f32 %v72, 0.5
    %v75 = vmul.f32 %v73, 0.5
    %v76 = vmul.f32 %v74, 0.5
    %v77 = vtanh.pop %v75
    %v78 = vtanh.pop %v76
    %v79 = vmul.f32 %v77, 0.5
    %v80 = vmul.f32 %v78, 0.5
    %v81 = vadd.f32 %v79, 0.5
    %v82 = vadd.f32 %v80, 0.5
    %v83 = vlog2.pop %v81
    %v84 = vmul.f32 %v83, 0.6931472
    %v85 = vlog2.pop %v82
    %v86 = vmul.f32 %v85, 0.6931472
    %v87 = vsub.f32 0.0, %v84
    %v88 = vsub.f32 0.0, %v86
    %v89 = vld [vmem:[#allocation2] sm:$0x3]
    %v90 = vld [vmem:[#allocation2 + $0x2] sm:$0x3]
    %v91 = vunpack.c.0.s8 %v89
    %v92 = vunpack.c.0.s8 %v90
    %v93 = vcvt.s32.f32 %v91
    %v94 = vcvt.s32.f32 %v92
    %vm95 = vcmp.gt.f32.partialorder %v93, 0.5
    %vm96 = vcmp.gt.f32.partialorder %v94, 0.5
    %v97 = vsel %vm95, 0.0, %v73
    %v98 = vsel %vm96, 0.0, %v74
    %v99 = vadd.f32 %v97, %v87
    %v100 = vadd.f32 %v98, %v88
    %v101 = vsub.f32 1.0, %v81
    %v102 = vsub.f32 1.0, %v82
    %v103 = vsel %vm95, %v81, %v101
    %v104 = vsel %vm96, %v82, %v102
    %v105 = vsub.f32 1.0, %v103
    %v106 = vsub.f32 1.0, %v104
    %v107 = vmul.f32 %v105, %v105
    %v108 = vmul.f32 %v106, %v106
    %v109 = vmul.f32 %v107, %v99
    %v110 = vmul.f32 %v108, %v100
    %v111 = vld [vmem:[#allocation7] sm:$0xff]
    %v112 = vadd.f32 %v109, %v110
    %v113 = vadd.f32 %v111, %v112
    %114 = vst [vmem:[#allocation7] sm:$0xff] %v113
    // Predicated region
    $region22: #{tpu_custom_call.1} parent=1 // pred_check
      _
    $region23: #{tpu_custom_call.1} parent=1 // pred_check_branch
      %116 = sbr.rel (0) target = $region25
    $region24: #{tpu_custom_call.1} parent=1 // pred_region
      %s118 = ssub.s32 128, 128
      %119 = vsyncadd [#allocation4], %s118
      %s121 = sshll.u32 [#allocation7], 4
      %s122 = int_to_ptr.vmem [resolvable:$true] %s121
      %124 = dma.vmem_to_hbm [thread:$0]  %s122, 128, %s2, [#allocation4]
    $region25: #{tpu_custom_call.1} parent=1 // pred_fallthru
      _
    // Predicated region
    $region26: #{tpu_custom_call.1} parent=1 // pred_check
      _
    $region27: #{tpu_custom_call.1} parent=1 // pred_check_branch
      %126 = sbr.rel (0) target = $region29
    $region28: #{tpu_custom_call.1} parent=1 // pred_region
      %127 = dma.done [#allocation4], 128
    $region29: #{tpu_custom_call.1} parent=1 // pred_fallthru
      _
    %128 = vsyncpa [#allocation3], 1
    %129 = vsyncpa [#allocation6], 1
    %130 = vsyncpa [#allocation4], 1

</llo_original>
